<compile_context>
chip_gen: v5e
topology: v5e:2x2
jax: 0.10.0
libtpu: 0.0.40
codegen_flags: <defaults>
</compile_context>

<pallas_src>
import functools

import jax
import jax.numpy as jnp
from jax.experimental import pallas as pl
from jax.experimental.pallas import tpu as pltpu


def _round_up(x, m):
    return (x + m - 1) // m * m


def _embed_gather_add_kernel(ids_ref, pos_ids_ref,        # scalar prefetch (SMEM)
                             tok_hbm_ref, pos_vmem_ref,   # inputs (HBM table, VMEM-resident pos table)
                             o_ref,                       # output (T, H) VMEM block
                             tok_buf, pos_buf, sem,       # scratch
                             *, block_tokens):
    blk = pl.program_id(0)
    base = blk * block_tokens

    # 1) Issue all T token-row gathers HBM -> VMEM; they all fly concurrently.
    for t in range(block_tokens):
        row = ids_ref[base + t]
        pltpu.make_async_copy(tok_hbm_ref.at[row], tok_buf.at[t], sem).start()

    # 2) While the token DMAs are in flight, gather position rows from the
    #    VMEM-resident position table (dynamic index on the untiled leading dim).
    for t in range(block_tokens):
        pid = pos_ids_ref[base + t]
        prow = pos_vmem_ref[pid]                    # (1, H)
        pos_buf[pl.ds(t, 1), :] = prow

    # 3) Wait for every token-row DMA (shape/byte-count is what matters here).
    for t in range(block_tokens):
        pltpu.make_async_copy(tok_hbm_ref.at[0], tok_buf.at[t], sem).wait()

    # 4) One dense (T, H) add + store (accumulate in f32; portable to v5e).
    acc = tok_buf[...].astype(jnp.float32) + pos_buf[...].astype(jnp.float32)
    o_ref[...] = acc.astype(o_ref.dtype)


@functools.partial(jax.jit, static_argnames=("token_block",))
def clip_text_embeddings(input_ids, token_table, pos_table, position_ids=None,
                         *, token_block=64):
    """input_ids: int [B, S]; token_table: [V, H]; pos_table: [P, H] -> [B, S, H]."""
    B, S = input_ids.shape
    V, H = token_table.shape
    P, H2 = pos_table.shape
    assert H == H2, "token/position embedding widths must match"

    if position_ids is None:
        position_ids = jnp.broadcast_to(
            jnp.arange(S, dtype=jnp.int32)[None, :], (B, S))
    else:
        position_ids = jnp.broadcast_to(position_ids.astype(jnp.int32), (B, S))

    n = B * S
    # Tokens per grid step: sublane-dense (multiple of 8), capped by token_block.
    T = min(_round_up(int(token_block), 8), _round_up(n, 8))
    n_pad = _round_up(n, T)

    # Clamp ids (DMA sources have no runtime OOB check) and pad to n_pad.
    flat_ids = jnp.clip(input_ids.reshape(-1).astype(jnp.int32), 0, V - 1)
    flat_pos = jnp.clip(position_ids.reshape(-1), 0, P - 1)
    flat_ids = jnp.pad(flat_ids, (0, n_pad - n))
    flat_pos = jnp.pad(flat_pos, (0, n_pad - n))

    # (P, 1, H): each position row on its own (untiled-major) slice -> safe
    # dynamic leading-dim indexing inside the kernel.
    pos_table_3d = pos_table.reshape(P, 1, H)

    out_dtype = jnp.promote_types(token_table.dtype, pos_table.dtype)
    kernel = functools.partial(_embed_gather_add_kernel, block_tokens=T)

    grid_spec = pltpu.PrefetchScalarGridSpec(
        num_scalar_prefetch=2,
        grid=(n_pad // T,),
        in_specs=[
            # Token table stays in HBM; rows are DMA-gathered manually.
            pl.BlockSpec(memory_space=pl.ANY),
            # Tiny position table: fully resident in VMEM (fetched once).
            pl.BlockSpec((P, 1, H), lambda i, ids, pids: (0, 0, 0)),
        ],
        out_specs=pl.BlockSpec((T, H), lambda i, ids, pids: (i, 0)),
        scratch_shapes=[
            pltpu.VMEM((T, H), token_table.dtype),   # gathered token rows
            pltpu.VMEM((T, H), pos_table.dtype),     # gathered position rows
            pltpu.SemaphoreType.DMA,                 # shared DMA completion sem
        ],
    )

    itemsize = jnp.dtype(out_dtype).itemsize
    cost = pl.CostEstimate(
        flops=n_pad * H,
        transcendentals=0,
        bytes_accessed=n_pad * H * itemsize * 3 + P * H * itemsize,
    )

    out_flat = pl.pallas_call(
        kernel,
        out_shape=jax.ShapeDtypeStruct((n_pad, H), out_dtype),
        grid_spec=grid_spec,
        compiler_params=pltpu.CompilerParams(
            dimension_semantics=("parallel",),   # independent blocks -> v7x 2 TCs
        ),
        cost_estimate=cost,
    )(flat_ids, flat_pos, token_table, pos_table_3d)

    return out_flat[:n].reshape(B, S, H)


if __name__ == "__main__":
    # Small synthetic config (mirrors the CLIPTextConfig fields used).
    vocab_size = 64
    max_position_embeddings = 16
    hidden_size = 32
    B, S = 2, 8

    key = jax.random.PRNGKey(0)
    k_tok, k_pos, k_ids = jax.random.split(key, 3)

    token_table = jax.random.normal(
        k_tok, (vocab_size, hidden_size), dtype=jnp.float32) * 0.02
    pos_table = jax.random.normal(
        k_pos, (max_position_embeddings, hidden_size), dtype=jnp.float32) * 0.02
    input_ids = jax.random.randint(k_ids, (B, S), 0, vocab_size, dtype=jnp.int32)

    # token_block=8 -> two token blocks for B*S=16 (exercises the multi-block path).
    out = clip_text_embeddings(input_ids, token_table, pos_table, token_block=8)
    out = jax.block_until_ready(out)

    # Pure-JAX reference for semantics.
    ref = token_table[input_ids] + pos_table[jnp.arange(S)][None, :, :]
    assert out.shape == (B, S, hidden_size)
    assert jnp.allclose(out, ref, atol=1e-6), "mismatch vs reference"

    print("KERNEL_OK")
</pallas_src>

<mosaic_0001>
module attributes {stable_mosaic.version = 11 : i64} {
  func.func @_embed_gather_add_kernel(%arg0: i32, %arg1: memref<16xi32, #tpu.memory_space<smem>>, %arg2: memref<16xi32, #tpu.memory_space<smem>>, %arg3: memref<64x32xf32, #tpu.memory_space<any>>, %arg4: memref<16x1x32xf32, #tpu.memory_space<vmem>>, %arg5: memref<8x32xf32, #tpu.memory_space<vmem>>, %arg6: memref<8x32xf32, #tpu.memory_space<vmem>>, %arg7: memref<8x32xf32, #tpu.memory_space<vmem>>, %arg8: memref<!tpu.dma_semaphore, #tpu.memory_space<semaphore_mem>>) attributes {dimension_semantics = [#tpu.dimension_semantics<parallel>], iteration_bounds = array<i64: 2>, scalar_prefetch = 2 : i64, scratch_operands = 3 : i64, tpu.core_type = #tpu.core_type<tc>, window_params = [{}, {pipeline_mode = #tpu.pipeline_mode<synchronous>, transform_indices = @transform_1, window_bounds = array<i64: 16, 1, 32>}, {transform_indices = @transform_2, window_bounds = array<i64: 8, 32>}]} {
    %c8_i32 = arith.constant 8 : i32
    %0 = arith.muli %arg0, %c8_i32 : i32
    %c0_i32 = arith.constant 0 : i32
    %1 = arith.addi %0, %c0_i32 : i32
    %2 = arith.index_cast %1 : i32 to index
    %3 = memref.load %arg1[%2] : memref<16xi32, #tpu.memory_space<smem>>
    %c0_i32_0 = arith.constant 0 : i32
    %c0_i32_1 = arith.constant 0 : i32
    %4 = tpu.memref_slice %arg3[%3, %c0_i32_1] : memref<64x32xf32, #tpu.memory_space<any>> -> memref<1x32xf32, #tpu.memory_space<any>>
    %5 = tpu.memref_squeeze %4 : memref<1x32xf32, #tpu.memory_space<any>> -> memref<32xf32, #tpu.memory_space<any>>
    %c0_i32_2 = arith.constant 0 : i32
    %6 = tpu.memref_slice %arg6[%c0_i32_0, %c0_i32_2] : memref<8x32xf32, #tpu.memory_space<vmem>> -> memref<1x32xf32, #tpu.memory_space<vmem>>
    %7 = tpu.memref_squeeze %6 : memref<1x32xf32, #tpu.memory_space<vmem>> -> memref<32xf32, #tpu.memory_space<vmem>>
    tpu.enqueue_dma source(%5 : memref<32xf32, #tpu.memory_space<any>>) target(%7 : memref<32xf32, #tpu.memory_space<vmem>>) target_semaphore(%arg8 : memref<!tpu.dma_semaphore, #tpu.memory_space<semaphore_mem>>)
    %c1_i32 = arith.constant 1 : i32
    %8 = arith.addi %0, %c1_i32 : i32
    %9 = arith.index_cast %8 : i32 to index
    %10 = memref.load %arg1[%9] : memref<16xi32, #tpu.memory_space<smem>>
    %c1_i32_3 = arith.constant 1 : i32
    %c0_i32_4 = arith.constant 0 : i32
    %11 = tpu.memref_slice %arg3[%10, %c0_i32_4] : memref<64x32xf32, #tpu.memory_space<any>> -> memref<1x32xf32, #tpu.memory_space<any>>
    %12 = tpu.memref_squeeze %11 : memref<1x32xf32, #tpu.memory_space<any>> -> memref<32xf32, #tpu.memory_space<any>>
    %c0_i32_5 = arith.constant 0 : i32
    %13 = tpu.memref_slice %arg6[%c1_i32_3, %c0_i32_5] : memref<8x32xf32, #tpu.memory_space<vmem>> -> memref<1x32xf32, #tpu.memory_space<vmem>>
    %14 = tpu.memref_squeeze %13 : memref<1x32xf32, #tpu.memory_space<vmem>> -> memref<32xf32, #tpu.memory_space<vmem>>
    tpu.enqueue_dma source(%12 : memref<32xf32, #tpu.memory_space<any>>) target(%14 : memref<32xf32, #tpu.memory_space<vmem>>) target_semaphore(%arg8 : memref<!tpu.dma_semaphore, #tpu.memory_space<semaphore_mem>>)
    %c2_i32 = arith.constant 2 : i32
    %15 = arith.addi %0, %c2_i32 : i32
    %16 = arith.index_cast %15 : i32 to index
    %17 = memref.load %arg1[%16] : memref<16xi32, #tpu.memory_space<smem>>
    %c2_i32_6 = arith.constant 2 : i32
    %c0_i32_7 = arith.constant 0 : i32
    %18 = tpu.memref_slice %arg3[%17, %c0_i32_7] : memref<64x32xf32, #tpu.memory_space<any>> -> memref<1x32xf32, #tpu.memory_space<any>>
    %19 = tpu.memref_squeeze %18 : memref<1x32xf32, #tpu.memory_space<any>> -> memref<32xf32, #tpu.memory_space<any>>
    %c0_i32_8 = arith.constant 0 : i32
    %20 = tpu.memref_slice %arg6[%c2_i32_6, %c0_i32_8] : memref<8x32xf32, #tpu.memory_space<vmem>> -> memref<1x32xf32, #tpu.memory_space<vmem>>
    %21 = tpu.memref_squeeze %20 : memref<1x32xf32, #tpu.memory_space<vmem>> -> memref<32xf32, #tpu.memory_space<vmem>>
    tpu.enqueue_dma source(%19 : memref<32xf32, #tpu.memory_space<any>>) target(%21 : memref<32xf32, #tpu.memory_space<vmem>>) target_semaphore(%arg8 : memref<!tpu.dma_semaphore, #tpu.memory_space<semaphore_mem>>)
    %c3_i32 = arith.constant 3 : i32
    %22 = arith.addi %0, %c3_i32 : i32
    %23 = arith.index_cast %22 : i32 to index
    %24 = memref.load %arg1[%23] : memref<16xi32, #tpu.memory_space<smem>>
    %c3_i32_9 = arith.constant 3 : i32
    %c0_i32_10 = arith.constant 0 : i32
    %25 = tpu.memref_slice %arg3[%24, %c0_i32_10] : memref<64x32xf32, #tpu.memory_space<any>> -> memref<1x32xf32, #tpu.memory_space<any>>
    %26 = tpu.memref_squeeze %25 : memref<1x32xf32, #tpu.memory_space<any>> -> memref<32xf32, #tpu.memory_space<any>>
    %c0_i32_11 = arith.constant 0 : i32
    %27 = tpu.memref_slice %arg6[%c3_i32_9, %c0_i32_11] : memref<8x32xf32, #tpu.memory_space<vmem>> -> memref<1x32xf32, #tpu.memory_space<vmem>>
    %28 = tpu.memref_squeeze %27 : memref<1x32xf32, #tpu.memory_space<vmem>> -> memref<32xf32, #tpu.memory_space<vmem>>
    tpu.enqueue_dma source(%26 : memref<32xf32, #tpu.memory_space<any>>) target(%28 : memref<32xf32, #tpu.memory_space<vmem>>) target_semaphore(%arg8 : memref<!tpu.dma_semaphore, #tpu.memory_space<semaphore_mem>>)
    %c4_i32 = arith.constant 4 : i32
    %29 = arith.addi %0, %c4_i32 : i32
    %30 = arith.index_cast %29 : i32 to index
    %31 = memref.load %arg1[%30] : memref<16xi32, #tpu.memory_space<smem>>
    %c4_i32_12 = arith.constant 4 : i32
    %c0_i32_13 = arith.constant 0 : i32
    %32 = tpu.memref_slice %arg3[%31, %c0_i32_13] : memref<64x32xf32, #tpu.memory_space<any>> -> memref<1x32xf32, #tpu.memory_space<any>>
    %33 = tpu.memref_squeeze %32 : memref<1x32xf32, #tpu.memory_space<any>> -> memref<32xf32, #tpu.memory_space<any>>
    %c0_i32_14 = arith.constant 0 : i32
    %34 = tpu.memref_slice %arg6[%c4_i32_12, %c0_i32_14] : memref<8x32xf32, #tpu.memory_space<vmem>> -> memref<1x32xf32, #tpu.memory_space<vmem>>
    %35 = tpu.memref_squeeze %34 : memref<1x32xf32, #tpu.memory_space<vmem>> -> memref<32xf32, #tpu.memory_space<vmem>>
    tpu.enqueue_dma source(%33 : memref<32xf32, #tpu.memory_space<any>>) target(%35 : memref<32xf32, #tpu.memory_space<vmem>>) target_semaphore(%arg8 : memref<!tpu.dma_semaphore, #tpu.memory_space<semaphore_mem>>)
    %c5_i32 = arith.constant 5 : i32
    %36 = arith.addi %0, %c5_i32 : i32
    %37 = arith.index_cast %36 : i32 to index
    %38 = memref.load %arg1[%37] : memref<16xi32, #tpu.memory_space<smem>>
    %c5_i32_15 = arith.constant 5 : i32
    %c0_i32_16 = arith.constant 0 : i32
    %39 = tpu.memref_slice %arg3[%38, %c0_i32_16] : memref<64x32xf32, #tpu.memory_space<any>> -> memref<1x32xf32, #tpu.memory_space<any>>
    %40 = tpu.memref_squeeze %39 : memref<1x32xf32, #tpu.memory_space<any>> -> memref<32xf32, #tpu.memory_space<any>>
    %c0_i32_17 = arith.constant 0 : i32
    %41 = tpu.memref_slice %arg6[%c5_i32_15, %c0_i32_17] : memref<8x32xf32, #tpu.memory_space<vmem>> -> memref<1x32xf32, #tpu.memory_space<vmem>>
    %42 = tpu.memref_squeeze %41 : memref<1x32xf32, #tpu.memory_space<vmem>> -> memref<32xf32, #tpu.memory_space<vmem>>
    tpu.enqueue_dma source(%40 : memref<32xf32, #tpu.memory_space<any>>) target(%42 : memref<32xf32, #tpu.memory_space<vmem>>) target_semaphore(%arg8 : memref<!tpu.dma_semaphore, #tpu.memory_space<semaphore_mem>>)
    %c6_i32 = arith.constant 6 : i32
    %43 = arith.addi %0, %c6_i32 : i32
    %44 = arith.index_cast %43 : i32 to index
    %45 = memref.load %arg1[%44] : memref<16xi32, #tpu.memory_space<smem>>
    %c6_i32_18 = arith.constant 6 : i32
    %c0_i32_19 = arith.constant 0 : i32
    %46 = tpu.memref_slice %arg3[%45, %c0_i32_19] : memref<64x32xf32, #tpu.memory_space<any>> -> memref<1x32xf32, #tpu.memory_space<any>>
    %47 = tpu.memref_squeeze %46 : memref<1x32xf32, #tpu.memory_space<any>> -> memref<32xf32, #tpu.memory_space<any>>
    %c0_i32_20 = arith.constant 0 : i32
    %48 = tpu.memref_slice %arg6[%c6_i32_18, %c0_i32_20] : memref<8x32xf32, #tpu.memory_space<vmem>> -> memref<1x32xf32, #tpu.memory_space<vmem>>
    %49 = tpu.memref_squeeze %48 : memref<1x32xf32, #tpu.memory_space<vmem>> -> memref<32xf32, #tpu.memory_space<vmem>>
    tpu.enqueue_dma source(%47 : memref<32xf32, #tpu.memory_space<any>>) target(%49 : memref<32xf32, #tpu.memory_space<vmem>>) target_semaphore(%arg8 : memref<!tpu.dma_semaphore, #tpu.memory_space<semaphore_mem>>)
    %c7_i32 = arith.constant 7 : i32
    %50 = arith.addi %0, %c7_i32 : i32
    %51 = arith.index_cast %50 : i32 to index
    %52 = memref.load %arg1[%51] : memref<16xi32, #tpu.memory_space<smem>>
    %c7_i32_21 = arith.constant 7 : i32
    %c0_i32_22 = arith.constant 0 : i32
    %53 = tpu.memref_slice %arg3[%52, %c0_i32_22] : memref<64x32xf32, #tpu.memory_space<any>> -> memref<1x32xf32, #tpu.memory_space<any>>
    %54 = tpu.memref_squeeze %53 : memref<1x32xf32, #tpu.memory_space<any>> -> memref<32xf32, #tpu.memory_space<any>>
    %c0_i32_23 = arith.constant 0 : i32
    %55 = tpu.memref_slice %arg6[%c7_i32_21, %c0_i32_23] : memref<8x32xf32, #tpu.memory_space<vmem>> -> memref<1x32xf32, #tpu.memory_space<vmem>>
    %56 = tpu.memref_squeeze %55 : memref<1x32xf32, #tpu.memory_space<vmem>> -> memref<32xf32, #tpu.memory_space<vmem>>
    tpu.enqueue_dma source(%54 : memref<32xf32, #tpu.memory_space<any>>) target(%56 : memref<32xf32, #tpu.memory_space<vmem>>) target_semaphore(%arg8 : memref<!tpu.dma_semaphore, #tpu.memory_space<semaphore_mem>>)
    %c0_i32_24 = arith.constant 0 : i32
    %57 = arith.addi %0, %c0_i32_24 : i32
    %58 = arith.index_cast %57 : i32 to index
    %59 = memref.load %arg2[%58] : memref<16xi32, #tpu.memory_space<smem>>
    %60 = arith.index_cast %59 : i32 to index
    %c0 = arith.constant 0 : index
    %c0_25 = arith.constant 0 : index
    %61 = vector.load %arg4[%60, %c0, %c0_25] : memref<16x1x32xf32, #tpu.memory_space<vmem>>, vector<1x1x32xf32>
    %62 = vector.shape_cast %61 : vector<1x1x32xf32> to vector<1x32xf32>
    %c0_26 = arith.constant 0 : index
    %c0_27 = arith.constant 0 : index
    %63 = vector.load %arg7[%c0_26, %c0_27] : memref<8x32xf32, #tpu.memory_space<vmem>>, vector<1x32xf32>
    tpu.vector_store %arg7[%c0_26, %c0_27], %62 {strides = array<i32>} : memref<8x32xf32, #tpu.memory_space<vmem>>, vector<1x32xf32>,
    %c1_i32_28 = arith.constant 1 : i32
    %64 = arith.addi %0, %c1_i32_28 : i32
    %65 = arith.index_cast %64 : i32 to index
    %66 = memref.load %arg2[%65] : memref<16xi32, #tpu.memory_space<smem>>
    %67 = arith.index_cast %66 : i32 to index
    %c0_29 = arith.constant 0 : index
    %c0_30 = arith.constant 0 : index
    %68 = vector.load %arg4[%67, %c0_29, %c0_30] : memref<16x1x32xf32, #tpu.memory_space<vmem>>, vector<1x1x32xf32>
    %69 = vector.shape_cast %68 : vector<1x1x32xf32> to vector<1x32xf32>
    %c1 = arith.constant 1 : index
    %c0_31 = arith.constant 0 : index
    %70 = vector.load %arg7[%c1, %c0_31] : memref<8x32xf32, #tpu.memory_space<vmem>>, vector<1x32xf32>
    tpu.vector_store %arg7[%c1, %c0_31], %69 {strides = array<i32>} : memref<8x32xf32, #tpu.memory_space<vmem>>, vector<1x32xf32>,
    %c2_i32_32 = arith.constant 2 : i32
    %71 = arith.addi %0, %c2_i32_32 : i32
    %72 = arith.index_cast %71 : i32 to index
    %73 = memref.load %arg2[%72] : memref<16xi32, #tpu.memory_space<smem>>
    %74 = arith.index_cast %73 : i32 to index
    %c0_33 = arith.constant 0 : index
    %c0_34 = arith.constant 0 : index
    %75 = vector.load %arg4[%74, %c0_33, %c0_34] : memref<16x1x32xf32, #tpu.memory_space<vmem>>, vector<1x1x32xf32>
    %76 = vector.shape_cast %75 : vector<1x1x32xf32> to vector<1x32xf32>
    %c2 = arith.constant 2 : index
    %c0_35 = arith.constant 0 : index
    %77 = vector.load %arg7[%c2, %c0_35] : memref<8x32xf32, #tpu.memory_space<vmem>>, vector<1x32xf32>
    tpu.vector_store %arg7[%c2, %c0_35], %76 {strides = array<i32>} : memref<8x32xf32, #tpu.memory_space<vmem>>, vector<1x32xf32>,
    %c3_i32_36 = arith.constant 3 : i32
    %78 = arith.addi %0, %c3_i32_36 : i32
    %79 = arith.index_cast %78 : i32 to index
    %80 = memref.load %arg2[%79] : memref<16xi32, #tpu.memory_space<smem>>
    %81 = arith.index_cast %80 : i32 to index
    %c0_37 = arith.constant 0 : index
    %c0_38 = arith.constant 0 : index
    %82 = vector.load %arg4[%81, %c0_37, %c0_38] : memref<16x1x32xf32, #tpu.memory_space<vmem>>, vector<1x1x32xf32>
    %83 = vector.shape_cast %82 : vector<1x1x32xf32> to vector<1x32xf32>
    %c3 = arith.constant 3 : index
    %c0_39 = arith.constant 0 : index
    %84 = vector.load %arg7[%c3, %c0_39] : memref<8x32xf32, #tpu.memory_space<vmem>>, vector<1x32xf32>
    tpu.vector_store %arg7[%c3, %c0_39], %83 {strides = array<i32>} : memref<8x32xf32, #tpu.memory_space<vmem>>, vector<1x32xf32>,
    %c4_i32_40 = arith.constant 4 : i32
    %85 = arith.addi %0, %c4_i32_40 : i32
    %86 = arith.index_cast %85 : i32 to index
    %87 = memref.load %arg2[%86] : memref<16xi32, #tpu.memory_space<smem>>
    %88 = arith.index_cast %87 : i32 to index
    %c0_41 = arith.constant 0 : index
    %c0_42 = arith.constant 0 : index
    %89 = vector.load %arg4[%88, %c0_41, %c0_42] : memref<16x1x32xf32, #tpu.memory_space<vmem>>, vector<1x1x32xf32>
    %90 = vector.shape_cast %89 : vector<1x1x32xf32> to vector<1x32xf32>
    %c4 = arith.constant 4 : index
    %c0_43 = arith.constant 0 : index
    %91 = vector.load %arg7[%c4, %c0_43] : memref<8x32xf32, #tpu.memory_space<vmem>>, vector<1x32xf32>
    tpu.vector_store %arg7[%c4, %c0_43], %90 {strides = array<i32>} : memref<8x32xf32, #tpu.memory_space<vmem>>, vector<1x32xf32>,
    %c5_i32_44 = arith.constant 5 : i32
    %92 = arith.addi %0, %c5_i32_44 : i32
    %93 = arith.index_cast %92 : i32 to index
    %94 = memref.load %arg2[%93] : memref<16xi32, #tpu.memory_space<smem>>
    %95 = arith.index_cast %94 : i32 to index
    %c0_45 = arith.constant 0 : index
    %c0_46 = arith.constant 0 : index
    %96 = vector.load %arg4[%95, %c0_45, %c0_46] : memref<16x1x32xf32, #tpu.memory_space<vmem>>, vector<1x1x32xf32>
    %97 = vector.shape_cast %96 : vector<1x1x32xf32> to vector<1x32xf32>
    %c5 = arith.constant 5 : index
    %c0_47 = arith.constant 0 : index
    %98 = vector.load %arg7[%c5, %c0_47] : memref<8x32xf32, #tpu.memory_space<vmem>>, vector<1x32xf32>
    tpu.vector_store %arg7[%c5, %c0_47], %97 {strides = array<i32>} : memref<8x32xf32, #tpu.memory_space<vmem>>, vector<1x32xf32>,
    %c6_i32_48 = arith.constant 6 : i32
    %99 = arith.addi %0, %c6_i32_48 : i32
    %100 = arith.index_cast %99 : i32 to index
    %101 = memref.load %arg2[%100] : memref<16xi32, #tpu.memory_space<smem>>
    %102 = arith.index_cast %101 : i32 to index
    %c0_49 = arith.constant 0 : index
    %c0_50 = arith.constant 0 : index
    %103 = vector.load %arg4[%102, %c0_49, %c0_50] : memref<16x1x32xf32, #tpu.memory_space<vmem>>, vector<1x1x32xf32>
    %104 = vector.shape_cast %103 : vector<1x1x32xf32> to vector<1x32xf32>
    %c6 = arith.constant 6 : index
    %c0_51 = arith.constant 0 : index
    %105 = vector.load %arg7[%c6, %c0_51] : memref<8x32xf32, #tpu.memory_space<vmem>>, vector<1x32xf32>
    tpu.vector_store %arg7[%c6, %c0_51], %104 {strides = array<i32>} : memref<8x32xf32, #tpu.memory_space<vmem>>, vector<1x32xf32>,
    %c7_i32_52 = arith.constant 7 : i32
    %106 = arith.addi %0, %c7_i32_52 : i32
    %107 = arith.index_cast %106 : i32 to index
    %108 = memref.load %arg2[%107] : memref<16xi32, #tpu.memory_space<smem>>
    %109 = arith.index_cast %108 : i32 to index
    %c0_53 = arith.constant 0 : index
    %c0_54 = arith.constant 0 : index
    %110 = vector.load %arg4[%109, %c0_53, %c0_54] : memref<16x1x32xf32, #tpu.memory_space<vmem>>, vector<1x1x32xf32>
    %111 = vector.shape_cast %110 : vector<1x1x32xf32> to vector<1x32xf32>
    %c7 = arith.constant 7 : index
    %c0_55 = arith.constant 0 : index
    %112 = vector.load %arg7[%c7, %c0_55] : memref<8x32xf32, #tpu.memory_space<vmem>>, vector<1x32xf32>
    tpu.vector_store %arg7[%c7, %c0_55], %111 {strides = array<i32>} : memref<8x32xf32, #tpu.memory_space<vmem>>, vector<1x32xf32>,
    %c0_i32_56 = arith.constant 0 : i32
    %c0_i32_57 = arith.constant 0 : i32
    %c0_i32_58 = arith.constant 0 : i32
    %113 = tpu.memref_slice %arg3[%c0_i32_56, %c0_i32_58] : memref<64x32xf32, #tpu.memory_space<any>> -> memref<1x32xf32, #tpu.memory_space<any>>
    %114 = tpu.memref_squeeze %113 : memref<1x32xf32, #tpu.memory_space<any>> -> memref<32xf32, #tpu.memory_space<any>>
    %c0_i32_59 = arith.constant 0 : i32
    %115 = tpu.memref_slice %arg6[%c0_i32_57, %c0_i32_59] : memref<8x32xf32, #tpu.memory_space<vmem>> -> memref<1x32xf32, #tpu.memory_space<vmem>>
    %116 = tpu.memref_squeeze %115 : memref<1x32xf32, #tpu.memory_space<vmem>> -> memref<32xf32, #tpu.memory_space<vmem>>
    tpu.wait_dma2 semaphore(%arg8 : memref<!tpu.dma_semaphore, #tpu.memory_space<semaphore_mem>>) src(%114 : memref<32xf32, #tpu.memory_space<any>>) dst(%116 : memref<32xf32, #tpu.memory_space<vmem>>)
    %c0_i32_60 = arith.constant 0 : i32
    %c1_i32_61 = arith.constant 1 : i32
    %c0_i32_62 = arith.constant 0 : i32
    %117 = tpu.memref_slice %arg3[%c0_i32_60, %c0_i32_62] : memref<64x32xf32, #tpu.memory_space<any>> -> memref<1x32xf32, #tpu.memory_space<any>>
    %118 = tpu.memref_squeeze %117 : memref<1x32xf32, #tpu.memory_space<any>> -> memref<32xf32, #tpu.memory_space<any>>
    %c0_i32_63 = arith.constant 0 : i32
    %119 = tpu.memref_slice %arg6[%c1_i32_61, %c0_i32_63] : memref<8x32xf32, #tpu.memory_space<vmem>> -> memref<1x32xf32, #tpu.memory_space<vmem>>
    %120 = tpu.memref_squeeze %119 : memref<1x32xf32, #tpu.memory_space<vmem>> -> memref<32xf32, #tpu.memory_space<vmem>>
    tpu.wait_dma2 semaphore(%arg8 : memref<!tpu.dma_semaphore, #tpu.memory_space<semaphore_mem>>) src(%118 : memref<32xf32, #tpu.memory_space<any>>) dst(%120 : memref<32xf32, #tpu.memory_space<vmem>>)
    %c0_i32_64 = arith.constant 0 : i32
    %c2_i32_65 = arith.constant 2 : i32
    %c0_i32_66 = arith.constant 0 : i32
    %121 = tpu.memref_slice %arg3[%c0_i32_64, %c0_i32_66] : memref<64x32xf32, #tpu.memory_space<any>> -> memref<1x32xf32, #tpu.memory_space<any>>
    %122 = tpu.memref_squeeze %121 : memref<1x32xf32, #tpu.memory_space<any>> -> memref<32xf32, #tpu.memory_space<any>>
    %c0_i32_67 = arith.constant 0 : i32
    %123 = tpu.memref_slice %arg6[%c2_i32_65, %c0_i32_67] : memref<8x32xf32, #tpu.memory_space<vmem>> -> memref<1x32xf32, #tpu.memory_space<vmem>>
    %124 = tpu.memref_squeeze %123 : memref<1x32xf32, #tpu.memory_space<vmem>> -> memref<32xf32, #tpu.memory_space<vmem>>
    tpu.wait_dma2 semaphore(%arg8 : memref<!tpu.dma_semaphore, #tpu.memory_space<semaphore_mem>>) src(%122 : memref<32xf32, #tpu.memory_space<any>>) dst(%124 : memref<32xf32, #tpu.memory_space<vmem>>)
    %c0_i32_68 = arith.constant 0 : i32
    %c3_i32_69 = arith.constant 3 : i32
    %c0_i32_70 = arith.constant 0 : i32
    %125 = tpu.memref_slice %arg3[%c0_i32_68, %c0_i32_70] : memref<64x32xf32, #tpu.memory_space<any>> -> memref<1x32xf32, #tpu.memory_space<any>>
    %126 = tpu.memref_squeeze %125 : memref<1x32xf32, #tpu.memory_space<any>> -> memref<32xf32, #tpu.memory_space<any>>
    %c0_i32_71 = arith.constant 0 : i32
    %127 = tpu.memref_slice %arg6[%c3_i32_69, %c0_i32_71] : memref<8x32xf32, #tpu.memory_space<vmem>> -> memref<1x32xf32, #tpu.memory_space<vmem>>
    %128 = tpu.memref_squeeze %127 : memref<1x32xf32, #tpu.memory_space<vmem>> -> memref<32xf32, #tpu.memory_space<vmem>>
    tpu.wait_dma2 semaphore(%arg8 : memref<!tpu.dma_semaphore, #tpu.memory_space<semaphore_mem>>) src(%126 : memref<32xf32, #tpu.memory_space<any>>) dst(%128 : memref<32xf32, #tpu.memory_space<vmem>>)
    %c0_i32_72 = arith.constant 0 : i32
    %c4_i32_73 = arith.constant 4 : i32
    %c0_i32_74 = arith.constant 0 : i32
    %129 = tpu.memref_slice %arg3[%c0_i32_72, %c0_i32_74] : memref<64x32xf32, #tpu.memory_space<any>> -> memref<1x32xf32, #tpu.memory_space<any>>
    %130 = tpu.memref_squeeze %129 : memref<1x32xf32, #tpu.memory_space<any>> -> memref<32xf32, #tpu.memory_space<any>>
    %c0_i32_75 = arith.constant 0 : i32
    %131 = tpu.memref_slice %arg6[%c4_i32_73, %c0_i32_75] : memref<8x32xf32, #tpu.memory_space<vmem>> -> memref<1x32xf32, #tpu.memory_space<vmem>>
    %132 = tpu.memref_squeeze %131 : memref<1x32xf32, #tpu.memory_space<vmem>> -> memref<32xf32, #tpu.memory_space<vmem>>
    tpu.wait_dma2 semaphore(%arg8 : memref<!tpu.dma_semaphore, #tpu.memory_space<semaphore_mem>>) src(%130 : memref<32xf32, #tpu.memory_space<any>>) dst(%132 : memref<32xf32, #tpu.memory_space<vmem>>)
    %c0_i32_76 = arith.constant 0 : i32
    %c5_i32_77 = arith.constant 5 : i32
    %c0_i32_78 = arith.constant 0 : i32
    %133 = tpu.memref_slice %arg3[%c0_i32_76, %c0_i32_78] : memref<64x32xf32, #tpu.memory_space<any>> -> memref<1x32xf32, #tpu.memory_space<any>>
    %134 = tpu.memref_squeeze %133 : memref<1x32xf32, #tpu.memory_space<any>> -> memref<32xf32, #tpu.memory_space<any>>
    %c0_i32_79 = arith.constant 0 : i32
    %135 = tpu.memref_slice %arg6[%c5_i32_77, %c0_i32_79] : memref<8x32xf32, #tpu.memory_space<vmem>> -> memref<1x32xf32, #tpu.memory_space<vmem>>
    %136 = tpu.memref_squeeze %135 : memref<1x32xf32, #tpu.memory_space<vmem>> -> memref<32xf32, #tpu.memory_space<vmem>>
    tpu.wait_dma2 semaphore(%arg8 : memref<!tpu.dma_semaphore, #tpu.memory_space<semaphore_mem>>) src(%134 : memref<32xf32, #tpu.memory_space<any>>) dst(%136 : memref<32xf32, #tpu.memory_space<vmem>>)
    %c0_i32_80 = arith.constant 0 : i32
    %c6_i32_81 = arith.constant 6 : i32
    %c0_i32_82 = arith.constant 0 : i32
    %137 = tpu.memref_slice %arg3[%c0_i32_80, %c0_i32_82] : memref<64x32xf32, #tpu.memory_space<any>> -> memref<1x32xf32, #tpu.memory_space<any>>
    %138 = tpu.memref_squeeze %137 : memref<1x32xf32, #tpu.memory_space<any>> -> memref<32xf32, #tpu.memory_space<any>>
    %c0_i32_83 = arith.constant 0 : i32
    %139 = tpu.memref_slice %arg6[%c6_i32_81, %c0_i32_83] : memref<8x32xf32, #tpu.memory_space<vmem>> -> memref<1x32xf32, #tpu.memory_space<vmem>>
    %140 = tpu.memref_squeeze %139 : memref<1x32xf32, #tpu.memory_space<vmem>> -> memref<32xf32, #tpu.memory_space<vmem>>
    tpu.wait_dma2 semaphore(%arg8 : memref<!tpu.dma_semaphore, #tpu.memory_space<semaphore_mem>>) src(%138 : memref<32xf32, #tpu.memory_space<any>>) dst(%140 : memref<32xf32, #tpu.memory_space<vmem>>)
    %c0_i32_84 = arith.constant 0 : i32
    %c7_i32_85 = arith.constant 7 : i32
    %c0_i32_86 = arith.constant 0 : i32
    %141 = tpu.memref_slice %arg3[%c0_i32_84, %c0_i32_86] : memref<64x32xf32, #tpu.memory_space<any>> -> memref<1x32xf32, #tpu.memory_space<any>>
    %142 = tpu.memref_squeeze %141 : memref<1x32xf32, #tpu.memory_space<any>> -> memref<32xf32, #tpu.memory_space<any>>
    %c0_i32_87 = arith.constant 0 : i32
    %143 = tpu.memref_slice %arg6[%c7_i32_85, %c0_i32_87] : memref<8x32xf32, #tpu.memory_space<vmem>> -> memref<1x32xf32, #tpu.memory_space<vmem>>
    %144 = tpu.memref_squeeze %143 : memref<1x32xf32, #tpu.memory_space<vmem>> -> memref<32xf32, #tpu.memory_space<vmem>>
    tpu.wait_dma2 semaphore(%arg8 : memref<!tpu.dma_semaphore, #tpu.memory_space<semaphore_mem>>) src(%142 : memref<32xf32, #tpu.memory_space<any>>) dst(%144 : memref<32xf32, #tpu.memory_space<vmem>>)
    %c0_88 = arith.constant 0 : index
    %c0_89 = arith.constant 0 : index
    %145 = vector.load %arg6[%c0_88, %c0_89] : memref<8x32xf32, #tpu.memory_space<vmem>>, vector<8x32xf32>
    %c0_90 = arith.constant 0 : index
    %c0_91 = arith.constant 0 : index
    %146 = vector.load %arg7[%c0_90, %c0_91] : memref<8x32xf32, #tpu.memory_space<vmem>>, vector<8x32xf32>
    %147 = arith.addf %145, %146 : vector<8x32xf32>
    %c0_92 = arith.constant 0 : index
    %c0_93 = arith.constant 0 : index
    %148 = vector.load %arg5[%c0_92, %c0_93] : memref<8x32xf32, #tpu.memory_space<vmem>>, vector<8x32xf32>
    tpu.vector_store %arg5[%c0_92, %c0_93], %147 {strides = array<i32>} : memref<8x32xf32, #tpu.memory_space<vmem>>, vector<8x32xf32>,
    return
  }
  func.func @transform_1(%arg0: i32, %arg1: memref<16xi32, #tpu.memory_space<smem>>, %arg2: memref<16xi32, #tpu.memory_space<smem>>) -> (i32, i32, i32) {
    %c0_i32 = arith.constant 0 : i32
    %c0_i32_0 = arith.constant 0 : i32
    %c0_i32_1 = arith.constant 0 : i32
    %c0_i32_2 = arith.constant 0 : i32
    return %c0_i32, %c0_i32_0, %c0_i32_1 : i32, i32, i32
  }
  func.func @transform_2(%arg0: i32, %arg1: memref<16xi32, #tpu.memory_space<smem>>, %arg2: memref<16xi32, #tpu.memory_space<smem>>) -> (i32, i32) {
    %c0_i32 = arith.constant 0 : i32
    %c0_i32_0 = arith.constant 0 : i32
    return %arg0, %c0_i32 : i32, i32
  }
}

</mosaic_0001>

<llo_original>
// kernel: clip_text_embeddings.1
$region0: #{clip_text_embeddings.1}
  #allocation0 [shape = 'u32[]', space=smem, size = 0x4, offset = 0x4, fixed_abs, tag = 'smem constant byte address 0x4 - core index']
  #allocation1 [shape = 'u32[72,128]{1,0:T(1,128)}', space=vmem, size = 0x9000, scoped, tag = 'internal scratch']
  #allocation2 [shape = 'f32[8,32]{1,0:T(8,128)}', space=vmem, size = 0x1000, scoped, tag = 'scratch operand']
  #allocation3 [shape = 'f32[8,32]{1,0:T(8,128)}', space=vmem, size = 0x1000, scoped, tag = 'scratch operand']
  #allocation4 [shape = 's32[1]{0}', space=sflag, size = 0x4, scoped, tag = 'scratch operand']
  #allocation5 [shape = 's32[1]{0}', space=sflag, size = 0x4, scoped, tag = 'scoped memory for clip_text_embeddings.1']
  #allocation6 [shape = 'u8[512]{0}', space=smem, size = 0x200, scoped, tag = 'prefetched SMEM operand 0']
  #allocation7 [shape = 'u8[512]{0}', space=smem, size = 0x200, scoped, tag = 'prefetched SMEM operand 1']
  #allocation10 [shape = 's32[]', space=sflag, size = 0x4, offset = 0, fixed_abs, tag = 'sflag constant byte address 0x0 - dummy sync flag']
  #allocation11 [shape = 's32[]', space=sflag, size = 0x4, offset = 0, fixed_abs, tag = 'sflag constant byte address 0x0 - dummy sync flag']
  #allocation12 [shape = 's32[]', space=sflag, size = 0x4, offset = 0, fixed_abs, tag = 'sflag constant byte address 0x0 - dummy sync flag']
  #allocation13 [shape = 's32[]', space=sflag, size = 0x4, offset = 0, fixed_abs, tag = 'sflag constant byte address 0x0 - dummy sync flag']
  #allocation14 [shape = 's32[]', space=sflag, size = 0x4, offset = 0, fixed_abs, tag = 'sflag constant byte address 0x0 - dummy sync flag']
  #allocation15 [shape = 's32[]', space=sflag, size = 0x4, offset = 0, fixed_abs, tag = 'sflag constant byte address 0x0 - dummy sync flag']
  #allocation16 [shape = 's32[]', space=sflag, size = 0x4, offset = 0, fixed_abs, tag = 'sflag constant byte address 0x0 - dummy sync flag']
  #allocation17 [shape = 's32[]', space=sflag, size = 0x4, offset = 0, fixed_abs, tag = 'sflag constant byte address 0x0 - dummy sync flag']
  %s0 = inlined_call_operand.vmem [shape: s32[16], index: 0, kind: input, shape index: {}]
  %s1 = inlined_call_operand.vmem [shape: s32[16], index: 1, kind: input, shape index: {}]
  %s2 = inlined_call_operand.vmem [shape: f32[64,32], index: 2, kind: input, shape index: {}]
  %s3 = inlined_call_operand.vmem [shape: f32[16,1,32], index: 3, kind: input, shape index: {}]
  %s4 = inlined_call_operand.hbm [shape: f32[16,32], index: 4, kind: output, shape index: {}]
  %s5 = sld [smem:[#allocation0]]
  $region277: #{clip_text_embeddings.1} parent=0
    _
  %s7 = ssub.s32 1, %s5
  %s8 = scalar_select 0, %s7, %s5
  %s10 = sshll.u32 %s0, 4
  %s11 = int_to_ptr.vmem [resolvable:$true] %s10
  %13 = dma.vmem_to_smem %s11, 16, [#allocation6], [#allocation5]
  %s15 = sshll.u32 %s1, 4
  %s16 = int_to_ptr.vmem [resolvable:$true] %s15
  %18 = dma.vmem_to_smem %s16, 16, [#allocation7], [#allocation5]
  %20 = dma.done [#allocation5], 32
  %21 = sfence
  $region1: #{clip_text_embeddings.1} parent=0
    #allocation8 [shape = 'u8[8192]{0}', space=vmem, size = 0x2000, scoped, tag = 'output window, operand 0']
    #allocation9 [shape = 's32[2]{0}', space=sflag, size = 0x8, scoped, tag = 'scoped memory for clip_text_embeddings.1']
    %22 = vsyncpa [#allocation9], 0
    %s23 = scalar_lea.sflag [#allocation9], 1
    %24 = vsyncpa %s23, 0
    loop: start=0, step=1, limit=4
    $region2: #{clip_text_embeddings.1} parent=1 // loop_pre_header
      _
    $region3: #{clip_text_embeddings.1} parent=1 // loop_header
      %s26 = sphi 0, %s30
      %p27 = scmp.ge.s32.totalorder %s26, 4
      %s34 = sphi 0, %s34
      %s36 = sphi 0, %s34
      %s37 = sphi 0, %s36
      %s51 = sphi 0, %s37
      %s57 = sphi 0, %s59
      %s60 = sphi 0, %s57
      %s61 = sphi 0, %s60
      %s77 = sphi 0, %s61
    $region4: #{clip_text_embeddings.1} parent=1 // loop_header_branch
      %29 = sbr.rel (%p27) target = $region8
    $region5: #{clip_text_embeddings.1} parent=1 // loop_body
      %s31 = ssub.s32 %s26, 1
      %s32 = ssub.s32 %s26, 2
      %s33 = sadd.s32 %s26, 1
      %s35 = sadd.s32 %s34, 1
      %p38 = scmp.eq.s32.totalorder %s26, 1
      %p39 = scmp.ne.s32.totalorder %s34, %s36
      %p40 = scmp.eq.s32.totalorder %s26, 0
      %p41 = por %p39, %p40
      %p42 = scmp.ne.s32.totalorder %s34, %s36
      %p43 = scmp.eq.s32.totalorder %s31, 1
      %p44 = por %p42, %p43
      %p45 = scmp.ne.s32.totalorder %s36, %s37
      %p46 = scmp.eq.s32.totalorder %s31, 0
      %p47 = por %p45, %p46
      %p48 = scmp.ne.s32.totalorder %s36, %s37
      %p49 = scmp.eq.s32.totalorder %s32, 1
      %p50 = por %p48, %p49
      %p52 = scmp.ne.s32.totalorder %s37, %s51
      %p53 = scmp.eq.s32.totalorder %s32, 0
      %p54 = por %p52, %p53
      %s55 = ssub.s32 %s26, %s33
      %p56 = scmp.eq.s32.totalorder %s55, 0
      %s58 = sadd.s32 %s57, 1
      %s59 = scalar_select %p56, %s57, %s58
      %p62 = pneg %p56
      %p63 = scmp.eq.s32.totalorder %s26, 1
      %p64 = por %p62, %p63
      %p65 = scmp.ne.s32.totalorder %s57, %s60
      %p66 = scmp.eq.s32.totalorder %s26, 0
      %p67 = por %p65, %p66
      %p68 = scmp.ne.s32.totalorder %s57, %s60
      %p69 = scmp.eq.s32.totalorder %s31, 1
      %p70 = por %p68, %p69
      %p71 = scmp.ne.s32.totalorder %s60, %s61
      %p72 = scmp.eq.s32.totalorder %s31, 0
      %p73 = por %p71, %p72
      %p74 = scmp.ne.s32.totalorder %s60, %s61
      %p75 = scmp.eq.s32.totalorder %s32, 1
      %p76 = por %p74, %p75
      %p78 = scmp.ne.s32.totalorder %s61, %s77
      %p79 = scmp.eq.s32.totalorder %s32, 0
      %p80 = por %p78, %p79
      %p81 = scmp.le.s32.totalorder 1, %s26
      %p82 = scmp.lt.s32.totalorder %s26, 3
      %p83 = pnand %p81, %p82
      %p84 = pneg %p83
      // Predicated region
      $region9: #{clip_text_embeddings.1} parent=5 // pred_check
        _
      $region10: #{clip_text_embeddings.1} parent=5 // pred_check_branch
        %86 = sbr.rel (%p83) target = $region12
      $region11: #{clip_text_embeddings.1} parent=5 // pred_region
        %s87 = ssub.s32 %s26, 1
        // Predicated region
        $region13: #{clip_text_embeddings.1} parent=11 // pred_check
          %p88 = pneg %p47
        $region14: #{clip_text_embeddings.1} parent=11 // pred_check_branch
          %90 = sbr.rel (%p88) target = $region16
        $region15: #{clip_text_embeddings.1} parent=11 // pred_region
          _
        $region16: #{clip_text_embeddings.1} parent=11 // pred_fallthru
          _
      $region12: #{clip_text_embeddings.1} parent=5 // pred_fallthru
        _
      %p91 = scmp.lt.s32.totalorder %s26, 2
      // Predicated region
      $region17: #{clip_text_embeddings.1} parent=5 // pred_check
        %p92 = pneg %p91
      $region18: #{clip_text_embeddings.1} parent=5 // pred_check_branch
        %94 = sbr.rel (%p92) target = $region20
      $region19: #{clip_text_embeddings.1} parent=5 // pred_region
        _
      $region20: #{clip_text_embeddings.1} parent=5 // pred_fallthru
        _
      %p95 = scmp.le.s32.totalorder 1, %s26
      %p96 = scmp.lt.s32.totalorder %s26, 3
      %p97 = pnand %p95, %p96
      %p98 = pneg %p97
      // Predicated region
      $region21: #{clip_text_embeddings.1} parent=5 // pred_check
        _
      $region22: #{clip_text_embeddings.1} parent=5 // pred_check_branch
        %100 = sbr.rel (%p97) target = $region24
      $region23: #{clip_text_embeddings.1} parent=5 // pred_region
        %s101 = ssub.s32 %s26, 1
        %p102 = pneg %p47
        %p103 = pneg %p44
        %p104 = pneg %p73
        %p105 = pneg %p70
        %s106 = sand.u32 %s60, 1
        %s107 = scalar_lea.sflag [#allocation9], %s106
        %s108 = sand.u32 %s60, 1
        %s109 = smul.addr %s108, 8
        %s110 = scalar_lea.vmem [#allocation8], %s109
        %s111 = smul.u32 %s31, 8
        %s112 = sld [smem:[#allocation6 + %s111]]
        %s113 = scalar_lea.vmem %s2, %s112
        // Predicated region
        $region25: #{clip_text_embeddings.1} parent=23 // pred_check
          _
        $region26: #{clip_text_embeddings.1} parent=23 // pred_check_branch
          %115 = sbr.rel target = $region28
        $region27: #{clip_text_embeddings.1} parent=23 // pred_region
          // Predicated region
          $region40: #{clip_text_embeddings.1} parent=27 // pred_check
            _
          $region41: #{clip_text_embeddings.1} parent=27 // pred_check_branch
            %131 = sbr.rel (0) target = $region43
          $region42: #{clip_text_embeddings.1} parent=27 // pred_region
            %s133 = ssub.s32 2, 1
            loop: start=0, step=1, limit=1
            $region44: #{clip_text_embeddings.1} parent=42 // loop_pre_header
              _
            $region45: #{clip_text_embeddings.1} parent=42 // loop_header
              %s135 = sphi 0, %s139
              %p136 = scmp.ge.s32.totalorder %s135, 1
              %s140 = sphi %s113, %s113
              %s141 = sphi [#allocation2], [#allocation2]
            $region46: #{clip_text_embeddings.1} parent=42 // loop_header_branch
              %138 = sbr.rel (%p136) target = $region50
            $region47: #{clip_text_embeddings.1} parent=42 // loop_body
              %v142 = vld [vmem:[%s140] sm:%s133]
              %143 = vst [vmem:[%s141] sm:%s133] %v142
            $region48: #{clip_text_embeddings.1} parent=42 // loop_footer
              %s139 = sadd.s32 1, %s135
            $region49: #{clip_text_embeddings.1} parent=42 // loop_footer_branch
              %134 = sbr.rel target = $region45
            $region50: #{clip_text_embeddings.1} parent=42 // loop_exit
              _
          $region43: #{clip_text_embeddings.1} parent=27 // pred_fallthru
            _
        $region28: #{clip_text_embeddings.1} parent=23 // pred_fallthru
          _
        // Predicated region
        $region29: #{clip_text_embeddings.1} parent=23 // pred_check
          _
        $region30: #{clip_text_embeddings.1} parent=23 // pred_check_branch
          %117 = sbr.rel (0) target = $region32
        $region31: #{clip_text_embeddings.1} parent=23 // pred_region
          %s119 = ssub.s32 2, 1
          loop: start=0, step=1, limit=1
          $region33: #{clip_text_embeddings.1} parent=31 // loop_pre_header
            _
          $region34: #{clip_text_embeddings.1} parent=31 // loop_header
            %s121 = sphi 0, %s125
            %p122 = scmp.ge.s32.totalorder %s121, 1
            %s126 = sphi %s113, %s113
            %s127 = sphi [#allocation2], [#allocation2]
          $region35: #{clip_text_embeddings.1} parent=31 // loop_header_branch
            %124 = sbr.rel (%p122) target = $region39
          $region36: #{clip_text_embeddings.1} parent=31 // loop_body
            %v128 = vld [vmem:[%s126] sm:%s119]
            %129 = vst [vmem:[%s127] sm:%s119] %v128
          $region37: #{clip_text_embeddings.1} parent=31 // loop_footer
            %s125 = sadd.s32 1, %s121
          $region38: #{clip_text_embeddings.1} parent=31 // loop_footer_branch
            %120 = sbr.rel target = $region34
          $region39: #{clip_text_embeddings.1} parent=31 // loop_exit
            _
        $region32: #{clip_text_embeddings.1} parent=23 // pred_fallthru
          _
        // Predicated region
        $region51: #{clip_text_embeddings.1} parent=23 // pred_check
          _
        $region52: #{clip_text_embeddings.1} parent=23 // pred_check_branch
          %146 = sbr.rel (0) target = $region54
        $region53: #{clip_text_embeddings.1} parent=23 // pred_region
          %147 = vsyncadd [#allocation4], 16
        $region54: #{clip_text_embeddings.1} parent=23 // pred_fallthru
          _
        %s148 = sadd.s32 %s111, 1
        %s149 = sld [smem:[#allocation6 + %s148]]
        %s150 = scalar_lea.vmem %s2, %s149
        %s151 = scalar_lea.vmem [#allocation2], 1
        // Predicated region
        $region55: #{clip_text_embeddings.1} parent=23 // pred_check
          _
        $region56: #{clip_text_embeddings.1} parent=23 // pred_check_branch
          %153 = sbr.rel target = $region58
        $region57: #{clip_text_embeddings.1} parent=23 // pred_region
          // Predicated region
          $region70: #{clip_text_embeddings.1} parent=57 // pred_check
            _
          $region71: #{clip_text_embeddings.1} parent=57 // pred_check_branch
            %169 = sbr.rel (0) target = $region73
          $region72: #{clip_text_embeddings.1} parent=57 // pred_region
            %s171 = ssub.s32 2, 1
            loop: start=0, step=1, limit=1
            $region74: #{clip_text_embeddings.1} parent=72 // loop_pre_header
              _
            $region75: #{clip_text_embeddings.1} parent=72 // loop_header
              %s173 = sphi 0, %s177
              %p174 = scmp.ge.s32.totalorder %s173, 1
              %s178 = sphi %s150, %s150
              %s179 = sphi %s151, %s151
            $region76: #{clip_text_embeddings.1} parent=72 // loop_header_branch
              %176 = sbr.rel (%p174) target = $region80
            $region77: #{clip_text_embeddings.1} parent=72 // loop_body
              %v180 = vld [vmem:[%s178] sm:%s171]
              %181 = vst [vmem:[%s179] sm:%s171] %v180
            $region78: #{clip_text_embeddings.1} parent=72 // loop_footer
              %s177 = sadd.s32 1, %s173
            $region79: #{clip_text_embeddings.1} parent=72 // loop_footer_branch
              %172 = sbr.rel target = $region75
            $region80: #{clip_text_embeddings.1} parent=72 // loop_exit
              _
          $region73: #{clip_text_embeddings.1} parent=57 // pred_fallthru
            _
        $region58: #{clip_text_embeddings.1} parent=23 // pred_fallthru
          _
        // Predicated region
        $region59: #{clip_text_embeddings.1} parent=23 // pred_check
          _
        $region60: #{clip_text_embeddings.1} parent=23 // pred_check_branch
          %155 = sbr.rel (0) target = $region62
        $region61: #{clip_text_embeddings.1} parent=23 // pred_region
          %s157 = ssub.s32 2, 1
          loop: start=0, step=1, limit=1
          $region63: #{clip_text_embeddings.1} parent=61 // loop_pre_header
            _
          $region64: #{clip_text_embeddings.1} parent=61 // loop_header
            %s159 = sphi 0, %s163
            %p160 = scmp.ge.s32.totalorder %s159, 1
            %s164 = sphi %s150, %s150
            %s165 = sphi %s151, %s151
          $region65: #{clip_text_embeddings.1} parent=61 // loop_header_branch
            %162 = sbr.rel (%p160) target = $region69
          $region66: #{clip_text_embeddings.1} parent=61 // loop_body
            %v166 = vld [vmem:[%s164] sm:%s157]
            %167 = vst [vmem:[%s165] sm:%s157] %v166
          $region67: #{clip_text_embeddings.1} parent=61 // loop_footer
            %s163 = sadd.s32 1, %s159
          $region68: #{clip_text_embeddings.1} parent=61 // loop_footer_branch
            %158 = sbr.rel target = $region64
          $region69: #{clip_text_embeddings.1} parent=61 // loop_exit
            _
        $region62: #{clip_text_embeddings.1} parent=23 // pred_fallthru
          _
        // Predicated region
        $region81: #{clip_text_embeddings.1} parent=23 // pred_check
          _
        $region82: #{clip_text_embeddings.1} parent=23 // pred_check_branch
          %184 = sbr.rel (0) target = $region84
        $region83: #{clip_text_embeddings.1} parent=23 // pred_region
          %185 = vsyncadd [#allocation4], 16
        $region84: #{clip_text_embeddings.1} parent=23 // pred_fallthru
          _
        %s186 = sadd.s32 %s111, 2
        %s187 = sld [smem:[#allocation6 + %s186]]
        %s188 = scalar_lea.vmem %s2, %s187
        %s189 = scalar_lea.vmem [#allocation2], 2
        // Predicated region
        $region85: #{clip_text_embeddings.1} parent=23 // pred_check
          _
        $region86: #{clip_text_embeddings.1} parent=23 // pred_check_branch
          %191 = sbr.rel target = $region88
        $region87: #{clip_text_embeddings.1} parent=23 // pred_region
          // Predicated region
          $region100: #{clip_text_embeddings.1} parent=87 // pred_check
            _
          $region101: #{clip_text_embeddings.1} parent=87 // pred_check_branch
            %207 = sbr.rel (0) target = $region103
          $region102: #{clip_text_embeddings.1} parent=87 // pred_region
            %s209 = ssub.s32 2, 1
            loop: start=0, step=1, limit=1
            $region104: #{clip_text_embeddings.1} parent=102 // loop_pre_header
              _
            $region105: #{clip_text_embeddings.1} parent=102 // loop_header
              %s211 = sphi 0, %s215
              %p212 = scmp.ge.s32.totalorder %s211, 1
              %s216 = sphi %s188, %s188
              %s217 = sphi %s189, %s189
            $region106: #{clip_text_embeddings.1} parent=102 // loop_header_branch
              %214 = sbr.rel (%p212) target = $region110
            $region107: #{clip_text_embeddings.1} parent=102 // loop_body
              %v218 = vld [vmem:[%s216] sm:%s209]
              %219 = vst [vmem:[%s217] sm:%s209] %v218
            $region108: #{clip_text_embeddings.1} parent=102 // loop_footer
              %s215 = sadd.s32 1, %s211
            $region109: #{clip_text_embeddings.1} parent=102 // loop_footer_branch
              %210 = sbr.rel target = $region105
            $region110: #{clip_text_embeddings.1} parent=102 // loop_exit
              _
          $region103: #{clip_text_embeddings.1} parent=87 // pred_fallthru
            _
        $region88: #{clip_text_embeddings.1} parent=23 // pred_fallthru
          _
        // Predicated region
        $region89: #{clip_text_embeddings.1} parent=23 // pred_check
          _
        $region90: #{clip_text_embeddings.1} parent=23 // pred_check_branch
          %193 = sbr.rel (0) target = $region92
        $region91: #{clip_text_embeddings.1} parent=23 // pred_region
          %s195 = ssub.s32 2, 1
          loop: start=0, step=1, limit=1
          $region93: #{clip_text_embeddings.1} parent=91 // loop_pre_header
            _
          $region94: #{clip_text_embeddings.1} parent=91 // loop_header
            %s197 = sphi 0, %s201
            %p198 = scmp.ge.s32.totalorder %s197, 1
            %s202 = sphi %s188, %s188
            %s203 = sphi %s189, %s189
          $region95: #{clip_text_embeddings.1} parent=91 // loop_header_branch
            %200 = sbr.rel (%p198) target = $region99
          $region96: #{clip_text_embeddings.1} parent=91 // loop_body
            %v204 = vld [vmem:[%s202] sm:%s195]
            %205 = vst [vmem:[%s203] sm:%s195] %v204
          $region97: #{clip_text_embeddings.1} parent=91 // loop_footer
            %s201 = sadd.s32 1, %s197
          $region98: #{clip_text_embeddings.1} parent=91 // loop_footer_branch
            %196 = sbr.rel target = $region94
          $region99: #{clip_text_embeddings.1} parent=91 // loop_exit
            _
        $region92: #{clip_text_embeddings.1} parent=23 // pred_fallthru
          _
        // Predicated region
        $region111: #{clip_text_embeddings.1} parent=23 // pred_check
          _
        $region112: #{clip_text_embeddings.1} parent=23 // pred_check_branch
          %222 = sbr.rel (0) target = $region114
        $region113: #{clip_text_embeddings.1} parent=23 // pred_region
          %223 = vsyncadd [#allocation4], 16
        $region114: #{clip_text_embeddings.1} parent=23 // pred_fallthru
          _
        %s224 = sadd.s32 %s111, 3
        %s225 = sld [smem:[#allocation6 + %s224]]
        %s226 = scalar_lea.vmem %s2, %s225
        %s227 = scalar_lea.vmem [#allocation2], 3
        // Predicated region
        $region115: #{clip_text_embeddings.1} parent=23 // pred_check
          _
        $region116: #{clip_text_embeddings.1} parent=23 // pred_check_branch
          %229 = sbr.rel target = $region118
        $region117: #{clip_text_embeddings.1} parent=23 // pred_region
          // Predicated region
          $region130: #{clip_text_embeddings.1} parent=117 // pred_check
            _
          $region131: #{clip_text_embeddings.1} parent=117 // pred_check_branch
            %245 = sbr.rel (0) target = $region133
          $region132: #{clip_text_embeddings.1} parent=117 // pred_region
            %s247 = ssub.s32 2, 1
            loop: start=0, step=1, limit=1
            $region134: #{clip_text_embeddings.1} parent=132 // loop_pre_header
              _
            $region135: #{clip_text_embeddings.1} parent=132 // loop_header
              %s249 = sphi 0, %s253
              %p250 = scmp.ge.s32.totalorder %s249, 1
              %s254 = sphi %s226, %s226
              %s255 = sphi %s227, %s227
            $region136: #{clip_text_embeddings.1} parent=132 // loop_header_branch
              %252 = sbr.rel (%p250) target = $region140
            $region137: #{clip_text_embeddings.1} parent=132 // loop_body
              %v256 = vld [vmem:[%s254] sm:%s247]
              %257 = vst [vmem:[%s255] sm:%s247] %v256
            $region138: #{clip_text_embeddings.1} parent=132 // loop_footer
              %s253 = sadd.s32 1, %s249
            $region139: #{clip_text_embeddings.1} parent=132 // loop_footer_branch
              %248 = sbr.rel target = $region135
            $region140: #{clip_text_embeddings.1} parent=132 // loop_exit
              _
          $region133: #{clip_text_embeddings.1} parent=117 // pred_fallthru
            _
        $region118: #{clip_text_embeddings.1} parent=23 // pred_fallthru
          _
        // Predicated region
        $region119: #{clip_text_embeddings.1} parent=23 // pred_check
          _
        $region120: #{clip_text_embeddings.1} parent=23 // pred_check_branch
          %231 = sbr.rel (0) target = $region122
        $region121: #{clip_text_embeddings.1} parent=23 // pred_region
          %s233 = ssub.s32 2, 1
          loop: start=0, step=1, limit=1
          $region123: #{clip_text_embeddings.1} parent=121 // loop_pre_header
            _
          $region124: #{clip_text_embeddings.1} parent=121 // loop_header
            %s235 = sphi 0, %s239
            %p236 = scmp.ge.s32.totalorder %s235, 1
            %s240 = sphi %s226, %s226
            %s241 = sphi %s227, %s227
          $region125: #{clip_text_embeddings.1} parent=121 // loop_header_branch
            %238 = sbr.rel (%p236) target = $region129
          $region126: #{clip_text_embeddings.1} parent=121 // loop_body
            %v242 = vld [vmem:[%s240] sm:%s233]
            %243 = vst [vmem:[%s241] sm:%s233] %v242
          $region127: #{clip_text_embeddings.1} parent=121 // loop_footer
            %s239 = sadd.s32 1, %s235
          $region128: #{clip_text_embeddings.1} parent=121 // loop_footer_branch
            %234 = sbr.rel target = $region124
          $region129: #{clip_text_embeddings.1} parent=121 // loop_exit
            _
        $region122: #{clip_text_embeddings.1} parent=23 // pred_fallthru
          _
        // Predicated region
        $region141: #{clip_text_embeddings.1} parent=23 // pred_check
          _
        $region142: #{clip_text_embeddings.1} parent=23 // pred_check_branch
          %260 = sbr.rel (0) target = $region144
        $region143: #{clip_text_embeddings.1} parent=23 // pred_region
          %261 = vsyncadd [#allocation4], 16
        $region144: #{clip_text_embeddings.1} parent=23 // pred_fallthru
          _
        %s262 = sadd.s32 %s111, 4
        %s263 = sld [smem:[#allocation6 + %s262]]
        %s264 = scalar_lea.vmem %s2, %s263
        %s265 = scalar_lea.vmem [#allocation2], 4
        // Predicated region
        $region145: #{clip_text_embeddings.1} parent=23 // pred_check
          _
        $region146: #{clip_text_embeddings.1} parent=23 // pred_check_branch
          %267 = sbr.rel target = $region148
        $region147: #{clip_text_embeddings.1} parent=23 // pred_region
          // Predicated region
          $region160: #{clip_text_embeddings.1} parent=147 // pred_check
            _
          $region161: #{clip_text_embeddings.1} parent=147 // pred_check_branch
            %283 = sbr.rel (0) target = $region163
          $region162: #{clip_text_embeddings.1} parent=147 // pred_region
            %s285 = ssub.s32 2, 1
            loop: start=0, step=1, limit=1
            $region164: #{clip_text_embeddings.1} parent=162 // loop_pre_header
              _
            $region165: #{clip_text_embeddings.1} parent=162 // loop_header
              %s287 = sphi 0, %s291
              %p288 = scmp.ge.s32.totalorder %s287, 1
              %s292 = sphi %s264, %s264
              %s293 = sphi %s265, %s265
            $region166: #{clip_text_embeddings.1} parent=162 // loop_header_branch
              %290 = sbr.rel (%p288) target = $region170
            $region167: #{clip_text_embeddings.1} parent=162 // loop_body
              %v294 = vld [vmem:[%s292] sm:%s285]
              %295 = vst [vmem:[%s293] sm:%s285] %v294
            $region168: #{clip_text_embeddings.1} parent=162 // loop_footer
              %s291 = sadd.s32 1, %s287
            $region169: #{clip_text_embeddings.1} parent=162 // loop_footer_branch
              %286 = sbr.rel target = $region165
            $region170: #{clip_text_embeddings.1} parent=162 // loop_exit
              _
          $region163: #{clip_text_embeddings.1} parent=147 // pred_fallthru
            _
        $region148: #{clip_text_embeddings.1} parent=23 // pred_fallthru
          _
        // Predicated region
        $region149: #{clip_text_embeddings.1} parent=23 // pred_check
          _
        $region150: #{clip_text_embeddings.1} parent=23 // pred_check_branch
          %269 = sbr.rel (0) target = $region152
        $region151: #{clip_text_embeddings.1} parent=23 // pred_region
          %s271 = ssub.s32 2, 1
          loop: start=0, step=1, limit=1
          $region153: #{clip_text_embeddings.1} parent=151 // loop_pre_header
            _
          $region154: #{clip_text_embeddings.1} parent=151 // loop_header
            %s273 = sphi 0, %s277
            %p274 = scmp.ge.s32.totalorder %s273, 1
            %s278 = sphi %s264, %s264
            %s279 = sphi %s265, %s265
          $region155: #{clip_text_embeddings.1} parent=151 // loop_header_branch
            %276 = sbr.rel (%p274) target = $region159
          $region156: #{clip_text_embeddings.1} parent=151 // loop_body
            %v280 = vld [vmem:[%s278] sm:%s271]
            %281 = vst [vmem:[%s279] sm:%s271] %v280
          $region157: #{clip_text_embeddings.1} parent=151 // loop_footer
            %s277 = sadd.s32 1, %s273
          $region158: #{clip_text_embeddings.1} parent=151 // loop_footer_branch
            %272 = sbr.rel target = $region154
          $region159: #{clip_text_embeddings.1} parent=151 // loop_exit
            _
        $region152: #{clip_text_embeddings.1} parent=23 // pred_fallthru
          _
        // Predicated region
        $region171: #{clip_text_embeddings.1} parent=23 // pred_check
          _
        $region172: #{clip_text_embeddings.1} parent=23 // pred_check_branch
          %298 = sbr.rel (0) target = $region174
        $region173: #{clip_text_embeddings.1} parent=23 // pred_region
          %299 = vsyncadd [#allocation4], 16
        $region174: #{clip_text_embeddings.1} parent=23 // pred_fallthru
          _
        %s300 = sadd.s32 %s111, 5
        %s301 = sld [smem:[#allocation6 + %s300]]
        %s302 = scalar_lea.vmem %s2, %s301
        %s303 = scalar_lea.vmem [#allocation2], 5
        // Predicated region
        $region175: #{clip_text_embeddings.1} parent=23 // pred_check
          _
        $region176: #{clip_text_embeddings.1} parent=23 // pred_check_branch
          %305 = sbr.rel target = $region178
        $region177: #{clip_text_embeddings.1} parent=23 // pred_region
          // Predicated region
          $region190: #{clip_text_embeddings.1} parent=177 // pred_check
            _
          $region191: #{clip_text_embeddings.1} parent=177 // pred_check_branch
            %321 = sbr.rel (0) target = $region193
          $region192: #{clip_text_embeddings.1} parent=177 // pred_region
            %s323 = ssub.s32 2, 1
            loop: start=0, step=1, limit=1
            $region194: #{clip_text_embeddings.1} parent=192 // loop_pre_header
              _
            $region195: #{clip_text_embeddings.1} parent=192 // loop_header
              %s325 = sphi 0, %s329
              %p326 = scmp.ge.s32.totalorder %s325, 1
              %s330 = sphi %s302, %s302
              %s331 = sphi %s303, %s303
            $region196: #{clip_text_embeddings.1} parent=192 // loop_header_branch
              %328 = sbr.rel (%p326) target = $region200
            $region197: #{clip_text_embeddings.1} parent=192 // loop_body
              %v332 = vld [vmem:[%s330] sm:%s323]
              %333 = vst [vmem:[%s331] sm:%s323] %v332
            $region198: #{clip_text_embeddings.1} parent=192 // loop_footer
              %s329 = sadd.s32 1, %s325
            $region199: #{clip_text_embeddings.1} parent=192 // loop_footer_branch
              %324 = sbr.rel target = $region195
            $region200: #{clip_text_embeddings.1} parent=192 // loop_exit
              _
          $region193: #{clip_text_embeddings.1} parent=177 // pred_fallthru
            _
        $region178: #{clip_text_embeddings.1} parent=23 // pred_fallthru
          _
        // Predicated region
        $region179: #{clip_text_embeddings.1} parent=23 // pred_check
          _
        $region180: #{clip_text_embeddings.1} parent=23 // pred_check_branch
          %307 = sbr.rel (0) target = $region182
        $region181: #{clip_text_embeddings.1} parent=23 // pred_region
          %s309 = ssub.s32 2, 1
          loop: start=0, step=1, limit=1
          $region183: #{clip_text_embeddings.1} parent=181 // loop_pre_header
            _
          $region184: #{clip_text_embeddings.1} parent=181 // loop_header
            %s311 = sphi 0, %s315
            %p312 = scmp.ge.s32.totalorder %s311, 1
            %s316 = sphi %s302, %s302
            %s317 = sphi %s303, %s303
          $region185: #{clip_text_embeddings.1} parent=181 // loop_header_branch
            %314 = sbr.rel (%p312) target = $region189
          $region186: #{clip_text_embeddings.1} parent=181 // loop_body
            %v318 = vld [vmem:[%s316] sm:%s309]
            %319 = vst [vmem:[%s317] sm:%s309] %v318
          $region187: #{clip_text_embeddings.1} parent=181 // loop_footer
            %s315 = sadd.s32 1, %s311
          $region188: #{clip_text_embeddings.1} parent=181 // loop_footer_branch
            %310 = sbr.rel target = $region184
          $region189: #{clip_text_embeddings.1} parent=181 // loop_exit
            _
        $region182: #{clip_text_embeddings.1} parent=23 // pred_fallthru
          _
        // Predicated region
        $region201: #{clip_text_embeddings.1} parent=23 // pred_check
          _
        $region202: #{clip_text_embeddings.1} parent=23 // pred_check_branch
          %336 = sbr.rel (0) target = $region204
        $region203: #{clip_text_embeddings.1} parent=23 // pred_region
          %337 = vsyncadd [#allocation4], 16
        $region204: #{clip_text_embeddings.1} parent=23 // pred_fallthru
          _
        %s338 = sadd.s32 %s111, 6
        %s339 = sld [smem:[#allocation6 + %s338]]
        %s340 = scalar_lea.vmem %s2, %s339
        %s341 = scalar_lea.vmem [#allocation2], 6
        // Predicated region
        $region205: #{clip_text_embeddings.1} parent=23 // pred_check
          _
        $region206: #{clip_text_embeddings.1} parent=23 // pred_check_branch
          %343 = sbr.rel target = $region208
        $region207: #{clip_text_embeddings.1} parent=23 // pred_region
          // Predicated region
          $region220: #{clip_text_embeddings.1} parent=207 // pred_check
            _
          $region221: #{clip_text_embeddings.1} parent=207 // pred_check_branch
            %359 = sbr.rel (0) target = $region223
          $region222: #{clip_text_embeddings.1} parent=207 // pred_region
            %s361 = ssub.s32 2, 1
            loop: start=0, step=1, limit=1
            $region224: #{clip_text_embeddings.1} parent=222 // loop_pre_header
              _
            $region225: #{clip_text_embeddings.1} parent=222 // loop_header
              %s363 = sphi 0, %s367
              %p364 = scmp.ge.s32.totalorder %s363, 1
              %s368 = sphi %s340, %s340
              %s369 = sphi %s341, %s341
            $region226: #{clip_text_embeddings.1} parent=222 // loop_header_branch
              %366 = sbr.rel (%p364) target = $region230
            $region227: #{clip_text_embeddings.1} parent=222 // loop_body
              %v370 = vld [vmem:[%s368] sm:%s361]
              %371 = vst [vmem:[%s369] sm:%s361] %v370
            $region228: #{clip_text_embeddings.1} parent=222 // loop_footer
              %s367 = sadd.s32 1, %s363
            $region229: #{clip_text_embeddings.1} parent=222 // loop_footer_branch
              %362 = sbr.rel target = $region225
            $region230: #{clip_text_embeddings.1} parent=222 // loop_exit
              _
          $region223: #{clip_text_embeddings.1} parent=207 // pred_fallthru
            _
        $region208: #{clip_text_embeddings.1} parent=23 // pred_fallthru
          _
        // Predicated region
        $region209: #{clip_text_embeddings.1} parent=23 // pred_check
          _
        $region210: #{clip_text_embeddings.1} parent=23 // pred_check_branch
          %345 = sbr.rel (0) target = $region212
        $region211: #{clip_text_embeddings.1} parent=23 // pred_region
          %s347 = ssub.s32 2, 1
          loop: start=0, step=1, limit=1
          $region213: #{clip_text_embeddings.1} parent=211 // loop_pre_header
            _
          $region214: #{clip_text_embeddings.1} parent=211 // loop_header
            %s349 = sphi 0, %s353
            %p350 = scmp.ge.s32.totalorder %s349, 1
            %s354 = sphi %s340, %s340
            %s355 = sphi %s341, %s341
          $region215: #{clip_text_embeddings.1} parent=211 // loop_header_branch
            %352 = sbr.rel (%p350) target = $region219
          $region216: #{clip_text_embeddings.1} parent=211 // loop_body
            %v356 = vld [vmem:[%s354] sm:%s347]
            %357 = vst [vmem:[%s355] sm:%s347] %v356
          $region217: #{clip_text_embeddings.1} parent=211 // loop_footer
            %s353 = sadd.s32 1, %s349
          $region218: #{clip_text_embeddings.1} parent=211 // loop_footer_branch
            %348 = sbr.rel target = $region214
          $region219: #{clip_text_embeddings.1} parent=211 // loop_exit
            _
        $region212: #{clip_text_embeddings.1} parent=23 // pred_fallthru
          _
        // Predicated region
        $region231: #{clip_text_embeddings.1} parent=23 // pred_check
          _
        $region232: #{clip_text_embeddings.1} parent=23 // pred_check_branch
          %374 = sbr.rel (0) target = $region234
        $region233: #{clip_text_embeddings.1} parent=23 // pred_region
          %375 = vsyncadd [#allocation4], 16
        $region234: #{clip_text_embeddings.1} parent=23 // pred_fallthru
          _
        %s376 = sadd.s32 %s111, 7
        %s377 = sld [smem:[#allocation6 + %s376]]
        %s378 = scalar_lea.vmem %s2, %s377
        %s379 = scalar_lea.vmem [#allocation2], 7
        // Predicated region
        $region235: #{clip_text_embeddings.1} parent=23 // pred_check
          _
        $region236: #{clip_text_embeddings.1} parent=23 // pred_check_branch
          %381 = sbr.rel target = $region238
        $region237: #{clip_text_embeddings.1} parent=23 // pred_region
          // Predicated region
          $region250: #{clip_text_embeddings.1} parent=237 // pred_check
            _
          $region251: #{clip_text_embeddings.1} parent=237 // pred_check_branch
            %397 = sbr.rel (0) target = $region253
          $region252: #{clip_text_embeddings.1} parent=237 // pred_region
            %s399 = ssub.s32 2, 1
            loop: start=0, step=1, limit=1
            $region254: #{clip_text_embeddings.1} parent=252 // loop_pre_header
              _
            $region255: #{clip_text_embeddings.1} parent=252 // loop_header
              %s401 = sphi 0, %s405
              %p402 = scmp.ge.s32.totalorder %s401, 1
              %s406 = sphi %s378, %s378
              %s407 = sphi %s379, %s379
            $region256: #{clip_text_embeddings.1} parent=252 // loop_header_branch
              %404 = sbr.rel (%p402) target = $region260
            $region257: #{clip_text_embeddings.1} parent=252 // loop_body
              %v408 = vld [vmem:[%s406] sm:%s399]
              %409 = vst [vmem:[%s407] sm:%s399] %v408
            $region258: #{clip_text_embeddings.1} parent=252 // loop_footer
              %s405 = sadd.s32 1, %s401
            $region259: #{clip_text_embeddings.1} parent=252 // loop_footer_branch
              %400 = sbr.rel target = $region255
            $region260: #{clip_text_embeddings.1} parent=252 // loop_exit
              _
          $region253: #{clip_text_embeddings.1} parent=237 // pred_fallthru
            _
        $region238: #{clip_text_embeddings.1} parent=23 // pred_fallthru
          _
        // Predicated region
        $region239: #{clip_text_embeddings.1} parent=23 // pred_check
          _
        $region240: #{clip_text_embeddings.1} parent=23 // pred_check_branch
          %383 = sbr.rel (0) target = $region242
        $region241: #{clip_text_embeddings.1} parent=23 // pred_region
          %s385 = ssub.s32 2, 1
          loop: start=0, step=1, limit=1
          $region243: #{clip_text_embeddings.1} parent=241 // loop_pre_header
            _
          $region244: #{clip_text_embeddings.1} parent=241 // loop_header
            %s387 = sphi 0, %s391
            %p388 = scmp.ge.s32.totalorder %s387, 1
            %s392 = sphi %s378, %s378
            %s393 = sphi %s379, %s379
          $region245: #{clip_text_embeddings.1} parent=241 // loop_header_branch
            %390 = sbr.rel (%p388) target = $region249
          $region246: #{clip_text_embeddings.1} parent=241 // loop_body
            %v394 = vld [vmem:[%s392] sm:%s385]
            %395 = vst [vmem:[%s393] sm:%s385] %v394
          $region247: #{clip_text_embeddings.1} parent=241 // loop_footer
            %s391 = sadd.s32 1, %s387
          $region248: #{clip_text_embeddings.1} parent=241 // loop_footer_branch
            %386 = sbr.rel target = $region244
          $region249: #{clip_text_embeddings.1} parent=241 // loop_exit
            _
        $region242: #{clip_text_embeddings.1} parent=23 // pred_fallthru
          _
        // Predicated region
        $region261: #{clip_text_embeddings.1} parent=23 // pred_check
          _
        $region262: #{clip_text_embeddings.1} parent=23 // pred_check_branch
          %412 = sbr.rel (0) target = $region264
        $region263: #{clip_text_embeddings.1} parent=23 // pred_region
          %413 = vsyncadd [#allocation4], 16
        $region264: #{clip_text_embeddings.1} parent=23 // pred_fallthru
          _
        %s414 = sld [smem:[#allocation7 + %s111]]
        %s415 = scalar_lea.vmem %s3, %s414
        %v416 = vld [vmem:[%s415] sm:$0x1]
        %vm417 = vcmask 253952
        %418 = vst.msk [vmem:[#allocation3] sm:$0x1] %vm417, %v416
        %s419 = sld [smem:[#allocation7 + %s148]]
        %s420 = scalar_lea.vmem %s3, %s419
        %v421 = vld [vmem:[%s420] sm:$0x1]
        %422 = vst.msk [vmem:[#allocation3 + $0x1] sm:$0x1] %vm417, %v421
        %s423 = sld [smem:[#allocation7 + %s186]]
        %s424 = scalar_lea.vmem %s3, %s423
        %v425 = vld [vmem:[%s424] sm:$0x1]
        %426 = vst.msk [vmem:[#allocation3 + $0x2] sm:$0x1] %vm417, %v425
        %s427 = sld [smem:[#allocation7 + %s224]]
        %s428 = scalar_lea.vmem %s3, %s427
        %v429 = vld [vmem:[%s428] sm:$0x1]
        %430 = vst.msk [vmem:[#allocation3 + $0x3] sm:$0x1] %vm417, %v429
        %s431 = sld [smem:[#allocation7 + %s262]]
        %s432 = scalar_lea.vmem %s3, %s431
        %v433 = vld [vmem:[%s432] sm:$0x1]
        %434 = vst.msk [vmem:[#allocation3 + $0x4] sm:$0x1] %vm417, %v433
        %s435 = sld [smem:[#allocation7 + %s300]]
        %s436 = scalar_lea.vmem %s3, %s435
        %v437 = vld [vmem:[%s436] sm:$0x1]
        %438 = vst.msk [vmem:[#allocation3 + $0x5] sm:$0x1] %vm417, %v437
        %s439 = sld [smem:[#allocation7 + %s338]]
        %s440 = scalar_lea.vmem %s3, %s439
        %v441 = vld [vmem:[%s440] sm:$0x1]
        %442 = vst.msk [vmem:[#allocation3 + $0x6] sm:$0x1] %vm417, %v441
        %s443 = sld [smem:[#allocation7 + %s376]]
        %s444 = scalar_lea.vmem %s3, %s443
        %v445 = vld [vmem:[%s444] sm:$0x1]
        %446 = vst.msk [vmem:[#allocation3 + $0x7] sm:$0x1] %vm417, %v445
        %448 = dma.done [#allocation4], 16
        %450 = dma.done [#allocation4], 16
        %452 = dma.done [#allocation4], 16
        %454 = dma.done [#allocation4], 16
        %456 = dma.done [#allocation4], 16
        %458 = dma.done [#allocation4], 16
        %460 = dma.done [#allocation4], 16
        %462 = dma.done [#allocation4], 16
        %v463 = vld [vmem:[#allocation2] sm:$0xff]
        %v464 = vld [vmem:[#allocation3] sm:$0xff]
        %v465 = vadd.f32 %v463, %v464
        %vm466 = vcmask 261120
        %467 = vst.msk [vmem:[%s110] sm:$0xff] %vm466, %v465
        %s468 = sand.u32 %s60, 1
        %s469 = scalar_lea.sflag [#allocation9], %s468
        %s470 = sand.u32 %s60, 1
        %s471 = smul.addr %s470, 8
        %s472 = scalar_lea.vmem [#allocation8], %s471
        // Predicated region
        $region265: #{clip_text_embeddings.1} parent=23 // pred_check
          %p473 = pneg %p70
        $region266: #{clip_text_embeddings.1} parent=23 // pred_check_branch
          %475 = sbr.rel (%p473) target = $region268
        $region267: #{clip_text_embeddings.1} parent=23 // pred_region
          %477 = vsyncadd %s469, 0
          %s478 = smul.addr %s31, 8
          %s479 = scalar_lea.hbm %s4, %s478
          %s481 = sshll.u32 %s472, 4
          %s482 = int_to_ptr.vmem [resolvable:$true] %s481
          %s483 = sshll.u32 %s479, 4
          %s484 = int_to_ptr.hbm [resolvable:$true] %s483
          %486 = dma.vmem_to_hbm [thread:$0]  %s482, 128, %s484, %s469
        $region268: #{clip_text_embeddings.1} parent=23 // pred_fallthru
          _
      $region24: #{clip_text_embeddings.1} parent=5 // pred_fallthru
        _
      %p487 = scmp.le.s32.totalorder 2, %s26
      // Predicated region
      $region269: #{clip_text_embeddings.1} parent=5 // pred_check
        %p488 = pneg %p487
      $region270: #{clip_text_embeddings.1} parent=5 // pred_check_branch
        %490 = sbr.rel (%p488) target = $region272
      $region271: #{clip_text_embeddings.1} parent=5 // pred_region
        %s491 = ssub.s32 %s26, 2
        // Predicated region
        $region273: #{clip_text_embeddings.1} parent=271 // pred_check
          %p492 = pneg %p76
        $region274: #{clip_text_embeddings.1} parent=271 // pred_check_branch
          %494 = sbr.rel (%p492) target = $region276
        $region275: #{clip_text_embeddings.1} parent=271 // pred_region
          %s495 = sand.u32 %s61, 1
          %s496 = scalar_lea.sflag [#allocation9], %s495
          %s497 = sand.u32 %s61, 1
          %s498 = smul.addr %s497, 8
          %s499 = scalar_lea.vmem [#allocation8], %s498
          %501 = dma.done %s496, 128
        $region276: #{clip_text_embeddings.1} parent=271 // pred_fallthru
          _
      $region272: #{clip_text_embeddings.1} parent=5 // pred_fallthru
        _
    $region6: #{clip_text_embeddings.1} parent=1 // loop_footer
      %s30 = sadd.s32 1, %s26
    $region7: #{clip_text_embeddings.1} parent=1 // loop_footer_branch
      %25 = sbr.rel target = $region3
    $region8: #{clip_text_embeddings.1} parent=1 // loop_exit
      _
    %502 = vsyncpa [#allocation9], 1
    %s503 = scalar_lea.sflag [#allocation9], 1
    %504 = vsyncpa %s503, 1
  %505 = vsyncmov [#allocation4]
  %s506 = vpop.sfrf %505
  %p507 = scmp.eq.s32.totalorder %s506, 0
  %p508 = pneg %p507
  %510 = shalt.err (%p508)

</llo_original>
